<compile_context>
chip_gen: v7x
topology: tpu7x:2x2x1
jax: 0.10.0
libtpu: 0.0.40
codegen_flags: <defaults>
</compile_context>

<pallas_src>
import functools

import jax
import jax.numpy as jnp
from jax import lax
from jax.experimental import pallas as pl
from jax.experimental.pallas import tpu as pltpu


def _round_up(x, m):
    return ((x + m - 1) // m) * m


def _choose_tiling(T, B, max_chunk_t=128):
    """Pick a time-chunk (grid tile along T) and the padded batch size."""
    B_pad = _round_up(max(B, 1), 8)
    if T <= max_chunk_t:
        return T, B_pad              # one block == full array dims -> always legal
    # Prefer even divisors so (chunk_t * B_pad) stays a multiple of 16 sublanes
    # (native bf16 tile); otherwise bump the batch pad to 16.
    even = [c for c in range(max_chunk_t, 0, -1) if T % c == 0 and c % 2 == 0]
    if even:
        return even[0], B_pad
    odd = [c for c in range(max_chunk_t, 0, -1) if T % c == 0]
    return odd[0], _round_up(max(B, 1), 16)


def gru_chunk_kernel(x_ref, wih_ref, whh_ref, out_ref, hn_ref, h_scr, gx_scr,
                     *, batch_pad, hidden_pad, chunk_t, unroll):
    """Processes `chunk_t` timesteps of a bias-free GRU layer per grid step.

    x_ref  : (chunk_t*B_pad, I_pad)   bf16, time-major rows grouped per step
    wih_ref: (I_pad, 3*H_pad)         bf16, fused (r,z,n) input->hidden weights
    whh_ref: (H_pad, 3*H_pad)         bf16, fused (r,z,n) hidden->hidden weights
    out_ref: (chunk_t*B_pad, H_pad)   f32 per-step hidden states
    hn_ref : (B_pad, H_pad)           f32 final hidden state (resident output)
    h_scr  : VMEM (B_pad, H_pad) f32  hidden-state carry across grid steps
    gx_scr : VMEM (chunk_t*B_pad, 3*H_pad) f32 hoisted input projections
    """
    bp = batch_pad
    H = hidden_pad

    # Zero the hidden-state carry on the first time-chunk only (h0 = 0).
    @pl.when(pl.program_id(0) == 0)
    def _():
        h_scr[...] = jnp.zeros_like(h_scr)

    # (1) Hoisted input projection: ONE fused MXU matmul covering every timestep
    #     of the chunk and all three gates.
    gx_scr[...] = jnp.dot(x_ref[...], wih_ref[...],
                          preferred_element_type=jnp.float32)

    # Hoist the hidden->hidden weights out of the recurrence.
    whh = whh_ref[...]

    def one_step(t, h):
        row = pl.multiple_of(t * bp, bp)
        gx = gx_scr[pl.ds(row, bp), :]                       # (B_pad, 3H) f32
        gh = jnp.dot(h.astype(whh.dtype), whh,
                     preferred_element_type=jnp.float32)     # single MXU push
        # PyTorch GRU cell (bias=False), gate order (r, z, n); slices are
        # lane-aligned because H is a multiple of 128.
        r = jax.nn.sigmoid(gx[:, :H] + gh[:, :H])
        z = jax.nn.sigmoid(gx[:, H:2 * H] + gh[:, H:2 * H])
        n = jnp.tanh(gx[:, 2 * H:] + r * gh[:, 2 * H:])
        h_new = (1.0 - z) * n + z * h                        # f32 gate math (v5e-safe)
        # Lane-dense 128-wide store, sublane-aligned start.
        out_ref[pl.ds(row, bp), :] = h_new.astype(out_ref.dtype)
        return h_new

    # Manually unrolled recurrence (unroll divides chunk_t by construction) so
    # the scheduler can overlap step t's elementwise tail with step t+1's MXU push.
    def body(i, h):
        for u in range(unroll):
            h = one_step(i * unroll + u, h)
        return h

    h_last = lax.fori_loop(0, chunk_t // unroll, body, h_scr[...])
    h_scr[...] = h_last
    hn_ref[...] = h_last.astype(hn_ref.dtype)


def gru_layer(x_tm, w_ih_fused, w_hh_fused, *, hidden_size, max_chunk_t=128):
    """One single-direction, bias-free GRU layer (h0 = 0).

    x_tm       : (T, B, I) float32, time-major
    w_ih_fused : (I_pad, 3*H_pad) bf16, zero-padded, gates (r,z,n) fused on last dim
    w_hh_fused : (H_pad, 3*H_pad) bf16
    Returns (output (T,B,H) f32, h_n (B,H) f32).
    """
    T, B, I = x_tm.shape
    H = hidden_size
    I_pad = w_ih_fused.shape[0]
    H_pad = w_hh_fused.shape[0]
    assert w_ih_fused.shape[1] == 3 * H_pad and w_hh_fused.shape[1] == 3 * H_pad
    assert I_pad >= I and H_pad >= H

    chunk_t, B_pad = _choose_tiling(T, B, max_chunk_t)
    block_rows = chunk_t * B_pad
    unroll = 4 if chunk_t % 4 == 0 else (2 if chunk_t % 2 == 0 else 1)

    # Pad batch/feature to (8,128) tiles and cast to bf16 for DMA/MXU; padded
    # weight rows/cols are zero so padded lanes/rows stay exactly zero.
    x_pad = jnp.zeros((T, B_pad, I_pad), jnp.bfloat16)
    x_pad = x_pad.at[:, :B, :I].set(x_tm.astype(jnp.bfloat16))
    x2d = x_pad.reshape(T * B_pad, I_pad)     # lane-dense 2-D slab for the kernel

    kernel = functools.partial(
        gru_chunk_kernel,
        batch_pad=B_pad, hidden_pad=H_pad, chunk_t=chunk_t, unroll=unroll)

    out2d, hn_pad = pl.pallas_call(
        kernel,
        grid=(T // chunk_t,),
        in_specs=[
            pl.BlockSpec((block_rows, I_pad), lambda t: (t, 0)),
            pl.BlockSpec((I_pad, 3 * H_pad), lambda t: (0, 0)),
            pl.BlockSpec((H_pad, 3 * H_pad), lambda t: (0, 0)),
        ],
        out_specs=[
            pl.BlockSpec((block_rows, H_pad), lambda t: (t, 0)),
            pl.BlockSpec((B_pad, H_pad), lambda t: (0, 0)),   # resident final-h output
        ],
        out_shape=[
            jax.ShapeDtypeStruct((T * B_pad, H_pad), jnp.float32),
            jax.ShapeDtypeStruct((B_pad, H_pad), jnp.float32),
        ],
        scratch_shapes=[
            pltpu.VMEM((B_pad, H_pad), jnp.float32),            # hidden-state carry
            pltpu.VMEM((block_rows, 3 * H_pad), jnp.float32),   # hoisted input projections
        ],
        compiler_params=pltpu.CompilerParams(
            dimension_semantics=("arbitrary",),      # recurrence is sequential over T chunks
            vmem_limit_bytes=32 * 1024 * 1024,       # explicit budget, safe on v5e/v6e/v7x
        ),
    )(x2d, w_ih_fused, w_hh_fused)

    out = out2d.reshape(T, B_pad, H_pad)[:, :B, :H]
    hn = hn_pad[:B, :H]
    return out, hn


class GRUBlockPallas:
    """Pallas port of GRUBlock(input_size, hidden_size, num_layers,
    bias=False, batch_first=True, bidirectional=False).

    The Sequential holds `num_layers` nn.GRU modules, each itself a stack of
    `num_layers` GRU layers.  Parameters are initialized like PyTorch
    (U(-1/sqrt(hidden_size), 1/sqrt(hidden_size))), then stored gate-fused,
    zero-padded to (8,128) tiles, transposed for `x @ W`, and cast to bf16.
    """

    def __init__(self, input_size, hidden_size, num_layers, key):
        self.input_size = int(input_size)
        self.hidden_size = int(hidden_size)
        self.num_layers = int(num_layers)
        self._H_pad = _round_up(self.hidden_size, 128)
        bound = 1.0 / float(hidden_size) ** 0.5
        self.modules = []
        for m in range(num_layers):              # Sequential: GRULayer1..N
            # PyTorch builds every nn.GRU with `input_size`, but that path only
            # runs for num_layers == 1; for the divergent num_layers > 1
            # workaround, later modules consume hidden_size-wide activations.
            module_in = self.input_size if m == 0 else self.hidden_size
            layers = []
            for l in range(num_layers):          # stacked layers inside one nn.GRU
                in_sz = module_in if l == 0 else self.hidden_size
                key, k1, k2 = jax.random.split(key, 3)
                # Sampled already in `x @ W` orientation: (3, in_sz, H), gates (r,z,n).
                w_ih = jax.random.uniform(k1, (3, in_sz, self.hidden_size),
                                          jnp.float32, -bound, bound)
                w_hh = jax.random.uniform(k2, (3, self.hidden_size, self.hidden_size),
                                          jnp.float32, -bound, bound)
                layers.append((self._fuse_pad(w_ih, in_sz),
                               self._fuse_pad(w_hh, self.hidden_size)))
            self.modules.append(layers)

    def _fuse_pad(self, w3, rows):
        """(3, rows, H) per-gate weights -> zero-padded, gate-fused (rows_pad, 3*H_pad) bf16."""
        H, H_pad = self.hidden_size, self._H_pad
        rows_pad = _round_up(rows, 128)
        fused = jnp.zeros((rows_pad, 3 * H_pad), jnp.float32)
        for g in range(3):
            fused = fused.at[:rows, g * H_pad:g * H_pad + H].set(w3[g])
        return fused.astype(jnp.bfloat16)

    def _run_gru(self, x, layers):
        # x: (B, T, in), batch_first=True.  Returns (output (B,T,H), h_n (L,B,H)),
        # exactly nn.GRU's return convention.
        cur = jnp.transpose(x, (1, 0, 2))        # time-major (T, B, in) for the kernel
        h_ns = []
        for (w_ih_f, w_hh_f) in layers:
            # TODO(synk): for stacked layers the (T,B,H) intermediate round-trips
            # through HBM between pallas_calls; a fused multi-layer kernel would keep
            # it in VMEM (only matters for the divergent num_layers > 1 path).
            cur, hn = gru_layer(cur, w_ih_f, w_hh_f, hidden_size=self.hidden_size)
            h_ns.append(hn)
        output = jnp.transpose(cur, (1, 0, 2))   # back to (B, T, H)
        h_n = jnp.stack(h_ns, axis=0)            # (num_layers, B, H)
        return output, h_n

    def __call__(self, x):
        out = x
        for idx, layers in enumerate(self.modules):
            out = self._run_gru(out, layers)     # (output, h_n), same as nn.GRU
            if idx + 1 < len(self.modules):
                # TODO(synk): PyTorch's Sequential would feed this tuple into the next
                # nn.GRU and crash for num_layers > 1; we forward the output tensor so
                # the graph stays well-defined.
                out = out[0]
        return out


if __name__ == "__main__":
    # Small shapes consistent with the module: batch=2, seq=8, feature=16, hidden=32.
    batch, seq, input_size, hidden_size, num_layers = 2, 8, 16, 32, 1

    key = jax.random.PRNGKey(0)
    kx, kp = jax.random.split(key)
    x = jax.random.normal(kx, (batch, seq, input_size), dtype=jnp.float32)

    block = GRUBlockPallas(input_size, hidden_size, num_layers, kp)
    output, h_n = block(x)   # matches PyTorch nn.GRU: (output (B,T,H), h_n (L,B,H))

    jax.block_until_ready(output)
    jax.block_until_ready(h_n)
    assert output.shape == (batch, seq, hidden_size)
    assert h_n.shape == (num_layers, batch, hidden_size)
    assert bool(jnp.all(jnp.isfinite(output)))
    print("KERNEL_OK")
</pallas_src>

<mosaic_0001>
module attributes {stable_mosaic.version = 11 : i64} {
  func.func @gru_chunk_kernel(%arg0: i32, %arg1: memref<64x128xbf16, #tpu.memory_space<vmem>>, %arg2: memref<128x384xbf16, #tpu.memory_space<vmem>>, %arg3: memref<128x384xbf16, #tpu.memory_space<vmem>>, %arg4: memref<64x128xf32, #tpu.memory_space<vmem>>, %arg5: memref<8x128xf32, #tpu.memory_space<vmem>>, %arg6: memref<8x128xf32, #tpu.memory_space<vmem>>, %arg7: memref<64x384xf32, #tpu.memory_space<vmem>>) attributes {dimension_semantics = [#tpu.dimension_semantics<arbitrary>], iteration_bounds = array<i64: 1>, scalar_prefetch = 0 : i64, scratch_operands = 2 : i64, tpu.core_type = #tpu.core_type<tc>, window_params = [{transform_indices = @transform_0, window_bounds = array<i64: 64, 128>}, {pipeline_mode = #tpu.pipeline_mode<synchronous>, transform_indices = @transform_1, window_bounds = array<i64: 128, 384>}, {pipeline_mode = #tpu.pipeline_mode<synchronous>, transform_indices = @transform_2, window_bounds = array<i64: 128, 384>}, {transform_indices = @transform_3, window_bounds = array<i64: 64, 128>}, {pipeline_mode = #tpu.pipeline_mode<synchronous>, transform_indices = @transform_4, window_bounds = array<i64: 8, 128>}]} {
    %c0_i32 = arith.constant 0 : i32
    %0 = arith.cmpi eq, %arg0, %c0_i32 : i32
    %1 = arith.extui %0 : i1 to i32
    %c0_i32_0 = arith.constant 0 : i32
    %2 = arith.cmpi ne, %1, %c0_i32_0 : i32
    scf.if %2 {
      %cst_16 = arith.constant 0.000000e+00 : f32
      %13 = vector.broadcast %cst_16 : f32 to vector<8x128xf32>
      %c0_17 = arith.constant 0 : index
      %c0_18 = arith.constant 0 : index
      %14 = vector.load %arg6[%c0_17, %c0_18] : memref<8x128xf32, #tpu.memory_space<vmem>>, vector<8x128xf32>
      tpu.vector_store %arg6[%c0_17, %c0_18], %13 {strides = array<i32>} : memref<8x128xf32, #tpu.memory_space<vmem>>, vector<8x128xf32>,
    } else {
    }
    %c0 = arith.constant 0 : index
    %c0_1 = arith.constant 0 : index
    %3 = vector.load %arg1[%c0, %c0_1] : memref<64x128xbf16, #tpu.memory_space<vmem>>, vector<64x128xbf16>
    %c0_2 = arith.constant 0 : index
    %c0_3 = arith.constant 0 : index
    %4 = vector.load %arg2[%c0_2, %c0_3] : memref<128x384xbf16, #tpu.memory_space<vmem>>, vector<128x384xbf16>
    %cst = arith.constant dense<0.000000e+00> : vector<64x384xf32>
    %5 = tpu.matmul %3, %4, %cst {dimension_numbers = #tpu.dot_dimension_numbers<[1], [0], [0], [1], [0, 0, 1, 1], [], []>} : vector<64x128xbf16>, vector<128x384xbf16>, vector<64x384xf32> -> vector<64x384xf32>
    %c0_4 = arith.constant 0 : index
    %c0_5 = arith.constant 0 : index
    %6 = vector.load %arg7[%c0_4, %c0_5] : memref<64x384xf32, #tpu.memory_space<vmem>>, vector<64x384xf32>
    tpu.vector_store %arg7[%c0_4, %c0_5], %5 {strides = array<i32>} : memref<64x384xf32, #tpu.memory_space<vmem>>, vector<64x384xf32>,
    %c0_6 = arith.constant 0 : index
    %c0_7 = arith.constant 0 : index
    %7 = vector.load %arg3[%c0_6, %c0_7] : memref<128x384xbf16, #tpu.memory_space<vmem>>, vector<128x384xbf16>
    %c0_8 = arith.constant 0 : index
    %c0_9 = arith.constant 0 : index
    %8 = vector.load %arg6[%c0_8, %c0_9] : memref<8x128xf32, #tpu.memory_space<vmem>>, vector<8x128xf32>
    %c0_i32_10 = arith.constant 0 : i32
    %c2_i32 = arith.constant 2 : i32
    %9 = arith.addi %c0_i32_10, %c2_i32 : i32
    %c1_i32 = arith.constant 1 : i32
    %10 = scf.for %arg8 = %c0_i32_10 to %9 step %c1_i32 iter_args(%arg9 = %8) -> (vector<8x128xf32>)  : i32 {
      %c4_i32 = arith.constant 4 : i32
      %13 = arith.muli %arg8, %c4_i32 : i32
      %c0_i32_16 = arith.constant 0 : i32
      %14 = arith.addi %13, %c0_i32_16 : i32
      %c8_i32 = arith.constant 8 : i32
      %15 = arith.muli %14, %c8_i32 : i32
      %16 = tpu.assume_multiple %15, 8 : i32
      %17 = arith.index_cast %16 : i32 to index
      %c0_17 = arith.constant 0 : index
      %18 = vector.load %arg7[%17, %c0_17] : memref<64x384xf32, #tpu.memory_space<vmem>>, vector<8x384xf32>
      %19 = arith.truncf %arg9 : vector<8x128xf32> to vector<8x128xbf16>
      %cst_18 = arith.constant dense<0.000000e+00> : vector<8x384xf32>
      %20 = tpu.matmul %19, %7, %cst_18 {dimension_numbers = #tpu.dot_dimension_numbers<[1], [0], [0], [1], [0, 0, 1, 1], [], []>} : vector<8x128xbf16>, vector<128x384xbf16>, vector<8x384xf32> -> vector<8x384xf32>
      %21 = vector.extract_strided_slice %18 {offsets = [0, 0], sizes = [8, 128], strides = [1, 1]} : vector<8x384xf32> to vector<8x128xf32>
      %22 = vector.extract_strided_slice %20 {offsets = [0, 0], sizes = [8, 128], strides = [1, 1]} : vector<8x384xf32> to vector<8x128xf32>
      %23 = arith.addf %21, %22 : vector<8x128xf32>
      %24 = arith.negf %23 : vector<8x128xf32>
      %25 = math.exp %24 : vector<8x128xf32>
      %cst_19 = arith.constant 1.000000e+00 : f32
      %26 = vector.broadcast %cst_19 : f32 to vector<8x128xf32>
      %27 = arith.addf %26, %25 : vector<8x128xf32>
      %28 = arith.divf %26, %27 : vector<8x128xf32>
      %29 = vector.extract_strided_slice %18 {offsets = [0, 128], sizes = [8, 128], strides = [1, 1]} : vector<8x384xf32> to vector<8x128xf32>
      %30 = vector.extract_strided_slice %20 {offsets = [0, 128], sizes = [8, 128], strides = [1, 1]} : vector<8x384xf32> to vector<8x128xf32>
      %31 = arith.addf %29, %30 : vector<8x128xf32>
      %32 = arith.negf %31 : vector<8x128xf32>
      %33 = math.exp %32 : vector<8x128xf32>
      %cst_20 = arith.constant 1.000000e+00 : f32
      %34 = vector.broadcast %cst_20 : f32 to vector<8x128xf32>
      %35 = arith.addf %34, %33 : vector<8x128xf32>
      %36 = arith.divf %34, %35 : vector<8x128xf32>
      %37 = vector.extract_strided_slice %18 {offsets = [0, 256], sizes = [8, 128], strides = [1, 1]} : vector<8x384xf32> to vector<8x128xf32>
      %38 = vector.extract_strided_slice %20 {offsets = [0, 256], sizes = [8, 128], strides = [1, 1]} : vector<8x384xf32> to vector<8x128xf32>
      %39 = arith.mulf %28, %38 : vector<8x128xf32>
      %40 = arith.addf %37, %39 : vector<8x128xf32>
      %41 = math.tanh %40 : vector<8x128xf32>
      %cst_21 = arith.constant 1.000000e+00 : f32
      %42 = vector.broadcast %cst_21 : f32 to vector<8x128xf32>
      %43 = arith.subf %42, %36 : vector<8x128xf32>
      %44 = arith.mulf %43, %41 : vector<8x128xf32>
      %45 = arith.mulf %36, %arg9 : vector<8x128xf32>
      %46 = arith.addf %44, %45 : vector<8x128xf32>
      %47 = arith.index_cast %16 : i32 to index
      %c0_22 = arith.constant 0 : index
      %48 = vector.load %arg4[%47, %c0_22] : memref<64x128xf32, #tpu.memory_space<vmem>>, vector<8x128xf32>
      tpu.vector_store %arg4[%47, %c0_22], %46 {strides = array<i32>} : memref<64x128xf32, #tpu.memory_space<vmem>>, vector<8x128xf32>,
      %c4_i32_23 = arith.constant 4 : i32
      %49 = arith.muli %arg8, %c4_i32_23 : i32
      %c1_i32_24 = arith.constant 1 : i32
      %50 = arith.addi %49, %c1_i32_24 : i32
      %c8_i32_25 = arith.constant 8 : i32
      %51 = arith.muli %50, %c8_i32_25 : i32
      %52 = tpu.assume_multiple %51, 8 : i32
      %53 = arith.index_cast %52 : i32 to index
      %c0_26 = arith.constant 0 : index
      %54 = vector.load %arg7[%53, %c0_26] : memref<64x384xf32, #tpu.memory_space<vmem>>, vector<8x384xf32>
      %55 = arith.truncf %46 : vector<8x128xf32> to vector<8x128xbf16>
      %cst_27 = arith.constant dense<0.000000e+00> : vector<8x384xf32>
      %56 = tpu.matmul %55, %7, %cst_27 {dimension_numbers = #tpu.dot_dimension_numbers<[1], [0], [0], [1], [0, 0, 1, 1], [], []>} : vector<8x128xbf16>, vector<128x384xbf16>, vector<8x384xf32> -> vector<8x384xf32>
      %57 = vector.extract_strided_slice %54 {offsets = [0, 0], sizes = [8, 128], strides = [1, 1]} : vector<8x384xf32> to vector<8x128xf32>
      %58 = vector.extract_strided_slice %56 {offsets = [0, 0], sizes = [8, 128], strides = [1, 1]} : vector<8x384xf32> to vector<8x128xf32>
      %59 = arith.addf %57, %58 : vector<8x128xf32>
      %60 = arith.negf %59 : vector<8x128xf32>
      %61 = math.exp %60 : vector<8x128xf32>
      %cst_28 = arith.constant 1.000000e+00 : f32
      %62 = vector.broadcast %cst_28 : f32 to vector<8x128xf32>
      %63 = arith.addf %62, %61 : vector<8x128xf32>
      %64 = arith.divf %62, %63 : vector<8x128xf32>
      %65 = vector.extract_strided_slice %54 {offsets = [0, 128], sizes = [8, 128], strides = [1, 1]} : vector<8x384xf32> to vector<8x128xf32>
      %66 = vector.extract_strided_slice %56 {offsets = [0, 128], sizes = [8, 128], strides = [1, 1]} : vector<8x384xf32> to vector<8x128xf32>
      %67 = arith.addf %65, %66 : vector<8x128xf32>
      %68 = arith.negf %67 : vector<8x128xf32>
      %69 = math.exp %68 : vector<8x128xf32>
      %cst_29 = arith.constant 1.000000e+00 : f32
      %70 = vector.broadcast %cst_29 : f32 to vector<8x128xf32>
      %71 = arith.addf %70, %69 : vector<8x128xf32>
      %72 = arith.divf %70, %71 : vector<8x128xf32>
      %73 = vector.extract_strided_slice %54 {offsets = [0, 256], sizes = [8, 128], strides = [1, 1]} : vector<8x384xf32> to vector<8x128xf32>
      %74 = vector.extract_strided_slice %56 {offsets = [0, 256], sizes = [8, 128], strides = [1, 1]} : vector<8x384xf32> to vector<8x128xf32>
      %75 = arith.mulf %64, %74 : vector<8x128xf32>
      %76 = arith.addf %73, %75 : vector<8x128xf32>
      %77 = math.tanh %76 : vector<8x128xf32>
      %cst_30 = arith.constant 1.000000e+00 : f32
      %78 = vector.broadcast %cst_30 : f32 to vector<8x128xf32>
      %79 = arith.subf %78, %72 : vector<8x128xf32>
      %80 = arith.mulf %79, %77 : vector<8x128xf32>
      %81 = arith.mulf %72, %46 : vector<8x128xf32>
      %82 = arith.addf %80, %81 : vector<8x128xf32>
      %83 = arith.index_cast %52 : i32 to index
      %c0_31 = arith.constant 0 : index
      %84 = vector.load %arg4[%83, %c0_31] : memref<64x128xf32, #tpu.memory_space<vmem>>, vector<8x128xf32>
      tpu.vector_store %arg4[%83, %c0_31], %82 {strides = array<i32>} : memref<64x128xf32, #tpu.memory_space<vmem>>, vector<8x128xf32>,
      %c4_i32_32 = arith.constant 4 : i32
      %85 = arith.muli %arg8, %c4_i32_32 : i32
      %c2_i32_33 = arith.constant 2 : i32
      %86 = arith.addi %85, %c2_i32_33 : i32
      %c8_i32_34 = arith.constant 8 : i32
      %87 = arith.muli %86, %c8_i32_34 : i32
      %88 = tpu.assume_multiple %87, 8 : i32
      %89 = arith.index_cast %88 : i32 to index
      %c0_35 = arith.constant 0 : index
      %90 = vector.load %arg7[%89, %c0_35] : memref<64x384xf32, #tpu.memory_space<vmem>>, vector<8x384xf32>
      %91 = arith.truncf %82 : vector<8x128xf32> to vector<8x128xbf16>
      %cst_36 = arith.constant dense<0.000000e+00> : vector<8x384xf32>
      %92 = tpu.matmul %91, %7, %cst_36 {dimension_numbers = #tpu.dot_dimension_numbers<[1], [0], [0], [1], [0, 0, 1, 1], [], []>} : vector<8x128xbf16>, vector<128x384xbf16>, vector<8x384xf32> -> vector<8x384xf32>
      %93 = vector.extract_strided_slice %90 {offsets = [0, 0], sizes = [8, 128], strides = [1, 1]} : vector<8x384xf32> to vector<8x128xf32>
      %94 = vector.extract_strided_slice %92 {offsets = [0, 0], sizes = [8, 128], strides = [1, 1]} : vector<8x384xf32> to vector<8x128xf32>
      %95 = arith.addf %93, %94 : vector<8x128xf32>
      %96 = arith.negf %95 : vector<8x128xf32>
      %97 = math.exp %96 : vector<8x128xf32>
      %cst_37 = arith.constant 1.000000e+00 : f32
      %98 = vector.broadcast %cst_37 : f32 to vector<8x128xf32>
      %99 = arith.addf %98, %97 : vector<8x128xf32>
      %100 = arith.divf %98, %99 : vector<8x128xf32>
      %101 = vector.extract_strided_slice %90 {offsets = [0, 128], sizes = [8, 128], strides = [1, 1]} : vector<8x384xf32> to vector<8x128xf32>
      %102 = vector.extract_strided_slice %92 {offsets = [0, 128], sizes = [8, 128], strides = [1, 1]} : vector<8x384xf32> to vector<8x128xf32>
      %103 = arith.addf %101, %102 : vector<8x128xf32>
      %104 = arith.negf %103 : vector<8x128xf32>
      %105 = math.exp %104 : vector<8x128xf32>
      %cst_38 = arith.constant 1.000000e+00 : f32
      %106 = vector.broadcast %cst_38 : f32 to vector<8x128xf32>
      %107 = arith.addf %106, %105 : vector<8x128xf32>
      %108 = arith.divf %106, %107 : vector<8x128xf32>
      %109 = vector.extract_strided_slice %90 {offsets = [0, 256], sizes = [8, 128], strides = [1, 1]} : vector<8x384xf32> to vector<8x128xf32>
      %110 = vector.extract_strided_slice %92 {offsets = [0, 256], sizes = [8, 128], strides = [1, 1]} : vector<8x384xf32> to vector<8x128xf32>
      %111 = arith.mulf %100, %110 : vector<8x128xf32>
      %112 = arith.addf %109, %111 : vector<8x128xf32>
      %113 = math.tanh %112 : vector<8x128xf32>
      %cst_39 = arith.constant 1.000000e+00 : f32
      %114 = vector.broadcast %cst_39 : f32 to vector<8x128xf32>
      %115 = arith.subf %114, %108 : vector<8x128xf32>
      %116 = arith.mulf %115, %113 : vector<8x128xf32>
      %117 = arith.mulf %108, %82 : vector<8x128xf32>
      %118 = arith.addf %116, %117 : vector<8x128xf32>
      %119 = arith.index_cast %88 : i32 to index
      %c0_40 = arith.constant 0 : index
      %120 = vector.load %arg4[%119, %c0_40] : memref<64x128xf32, #tpu.memory_space<vmem>>, vector<8x128xf32>
      tpu.vector_store %arg4[%119, %c0_40], %118 {strides = array<i32>} : memref<64x128xf32, #tpu.memory_space<vmem>>, vector<8x128xf32>,
      %c4_i32_41 = arith.constant 4 : i32
      %121 = arith.muli %arg8, %c4_i32_41 : i32
      %c3_i32 = arith.constant 3 : i32
      %122 = arith.addi %121, %c3_i32 : i32
      %c8_i32_42 = arith.constant 8 : i32
      %123 = arith.muli %122, %c8_i32_42 : i32
      %124 = tpu.assume_multiple %123, 8 : i32
      %125 = arith.index_cast %124 : i32 to index
      %c0_43 = arith.constant 0 : index
      %126 = vector.load %arg7[%125, %c0_43] : memref<64x384xf32, #tpu.memory_space<vmem>>, vector<8x384xf32>
      %127 = arith.truncf %118 : vector<8x128xf32> to vector<8x128xbf16>
      %cst_44 = arith.constant dense<0.000000e+00> : vector<8x384xf32>
      %128 = tpu.matmul %127, %7, %cst_44 {dimension_numbers = #tpu.dot_dimension_numbers<[1], [0], [0], [1], [0, 0, 1, 1], [], []>} : vector<8x128xbf16>, vector<128x384xbf16>, vector<8x384xf32> -> vector<8x384xf32>
      %129 = vector.extract_strided_slice %126 {offsets = [0, 0], sizes = [8, 128], strides = [1, 1]} : vector<8x384xf32> to vector<8x128xf32>
      %130 = vector.extract_strided_slice %128 {offsets = [0, 0], sizes = [8, 128], strides = [1, 1]} : vector<8x384xf32> to vector<8x128xf32>
      %131 = arith.addf %129, %130 : vector<8x128xf32>
      %132 = arith.negf %131 : vector<8x128xf32>
      %133 = math.exp %132 : vector<8x128xf32>
      %cst_45 = arith.constant 1.000000e+00 : f32
      %134 = vector.broadcast %cst_45 : f32 to vector<8x128xf32>
      %135 = arith.addf %134, %133 : vector<8x128xf32>
      %136 = arith.divf %134, %135 : vector<8x128xf32>
      %137 = vector.extract_strided_slice %126 {offsets = [0, 128], sizes = [8, 128], strides = [1, 1]} : vector<8x384xf32> to vector<8x128xf32>
      %138 = vector.extract_strided_slice %128 {offsets = [0, 128], sizes = [8, 128], strides = [1, 1]} : vector<8x384xf32> to vector<8x128xf32>
      %139 = arith.addf %137, %138 : vector<8x128xf32>
      %140 = arith.negf %139 : vector<8x128xf32>
      %141 = math.exp %140 : vector<8x128xf32>
      %cst_46 = arith.constant 1.000000e+00 : f32
      %142 = vector.broadcast %cst_46 : f32 to vector<8x128xf32>
      %143 = arith.addf %142, %141 : vector<8x128xf32>
      %144 = arith.divf %142, %143 : vector<8x128xf32>
      %145 = vector.extract_strided_slice %126 {offsets = [0, 256], sizes = [8, 128], strides = [1, 1]} : vector<8x384xf32> to vector<8x128xf32>
      %146 = vector.extract_strided_slice %128 {offsets = [0, 256], sizes = [8, 128], strides = [1, 1]} : vector<8x384xf32> to vector<8x128xf32>
      %147 = arith.mulf %136, %146 : vector<8x128xf32>
      %148 = arith.addf %145, %147 : vector<8x128xf32>
      %149 = math.tanh %148 : vector<8x128xf32>
      %cst_47 = arith.constant 1.000000e+00 : f32
      %150 = vector.broadcast %cst_47 : f32 to vector<8x128xf32>
      %151 = arith.subf %150, %144 : vector<8x128xf32>
      %152 = arith.mulf %151, %149 : vector<8x128xf32>
      %153 = arith.mulf %144, %118 : vector<8x128xf32>
      %154 = arith.addf %152, %153 : vector<8x128xf32>
      %155 = arith.index_cast %124 : i32 to index
      %c0_48 = arith.constant 0 : index
      %156 = vector.load %arg4[%155, %c0_48] : memref<64x128xf32, #tpu.memory_space<vmem>>, vector<8x128xf32>
      tpu.vector_store %arg4[%155, %c0_48], %154 {strides = array<i32>} : memref<64x128xf32, #tpu.memory_space<vmem>>, vector<8x128xf32>,
      scf.yield %154 : vector<8x128xf32>
    }
    %c2_i32_11 = arith.constant 2 : i32
    %c0_12 = arith.constant 0 : index
    %c0_13 = arith.constant 0 : index
    %11 = vector.load %arg6[%c0_12, %c0_13] : memref<8x128xf32, #tpu.memory_space<vmem>>, vector<8x128xf32>
    tpu.vector_store %arg6[%c0_12, %c0_13], %10 {strides = array<i32>} : memref<8x128xf32, #tpu.memory_space<vmem>>, vector<8x128xf32>,
    %c0_14 = arith.constant 0 : index
    %c0_15 = arith.constant 0 : index
    %12 = vector.load %arg5[%c0_14, %c0_15] : memref<8x128xf32, #tpu.memory_space<vmem>>, vector<8x128xf32>
    tpu.vector_store %arg5[%c0_14, %c0_15], %10 {strides = array<i32>} : memref<8x128xf32, #tpu.memory_space<vmem>>, vector<8x128xf32>,
    return
  }
  func.func @transform_0(%arg0: i32) -> (i32, i32) {
    %c0_i32 = arith.constant 0 : i32
    %c0_i32_0 = arith.constant 0 : i32
    return %arg0, %c0_i32 : i32, i32
  }
  func.func @transform_1(%arg0: i32) -> (i32, i32) {
    %c0_i32 = arith.constant 0 : i32
    %c0_i32_0 = arith.constant 0 : i32
    %c0_i32_1 = arith.constant 0 : i32
    return %c0_i32, %c0_i32_0 : i32, i32
  }
  func.func @transform_2(%arg0: i32) -> (i32, i32) {
    %c0_i32 = arith.constant 0 : i32
    %c0_i32_0 = arith.constant 0 : i32
    %c0_i32_1 = arith.constant 0 : i32
    return %c0_i32, %c0_i32_0 : i32, i32
  }
  func.func @transform_3(%arg0: i32) -> (i32, i32) {
    %c0_i32 = arith.constant 0 : i32
    %c0_i32_0 = arith.constant 0 : i32
    return %arg0, %c0_i32 : i32, i32
  }
  func.func @transform_4(%arg0: i32) -> (i32, i32) {
    %c0_i32 = arith.constant 0 : i32
    %c0_i32_0 = arith.constant 0 : i32
    %c0_i32_1 = arith.constant 0 : i32
    return %c0_i32, %c0_i32_0 : i32, i32
  }
}

</mosaic_0001>

<llo_original>
// kernel: tpu_custom_call.1
$region0: #{tpu_custom_call.1}
  #allocation0 [shape = 'u32[]', space=smem, size = 0x4, offset = 0x4, fixed_abs, tag = 'smem constant byte address 0x4 - core index']
  #allocation1 [shape = 'u32[144,128]{1,0:T(1,128)}', space=vmem, size = 0x12000, scoped, tag = 'internal scratch']
  #allocation2 [shape = 'f32[8,128]{1,0:T(8,128)}', space=vmem, size = 0x1000, scoped, tag = 'scratch operand']
  #allocation3 [shape = 'f32[64,384]{1,0:T(8,128)}', space=vmem, size = 0x18000, scoped, tag = 'scratch operand']
  %s0 = inlined_call_operand.hbm [shape: bf16[64,128], index: 0, kind: input, shape index: {}]
  %s1 = inlined_call_operand.hbm [shape: bf16[128,384], index: 1, kind: input, shape index: {}]
  %s2 = inlined_call_operand.hbm [shape: bf16[128,384], index: 2, kind: input, shape index: {}]
  %s3 = inlined_call_operand.hbm [shape: f32[64,128], index: 3, kind: output, shape index: {0}]
  %s4 = inlined_call_operand.hbm [shape: f32[8,128], index: 4, kind: output, shape index: {1}]
  %5 = xla_tuple %s3, %s4
  %s6 = sld [smem:[#allocation0]]
  $region53: #{tpu_custom_call.1} parent=0
    _
  %s8 = ssub.s32 1, %s6
  %s9 = scalar_select 0, %s8, %s6
  $region1: #{tpu_custom_call.1} parent=0
    #allocation4 [shape = 'u8[16384]{0}', space=vmem, size = 0x4000, scoped, tag = 'input window, operand 0, single buffered']
    #allocation5 [shape = 's32[1]{0}', space=sflag, size = 0x4, scoped, tag = 'scoped memory for tpu_custom_call.1']
    #allocation6 [shape = 's32[1]{0}', space=sflag, size = 0x4, scoped, tag = 'scoped memory for tpu_custom_call.1']
    #allocation7 [shape = 'u8[98304]{0}', space=vmem, size = 0x18000, scoped, tag = 'input window, operand 1, single buffered']
    #allocation8 [shape = 's32[1]{0}', space=sflag, size = 0x4, scoped, tag = 'scoped memory for tpu_custom_call.1']
    #allocation9 [shape = 'u8[98304]{0}', space=vmem, size = 0x18000, scoped, tag = 'input window, operand 2, single buffered']
    #allocation10 [shape = 'u8[32768]{0}', space=vmem, size = 0x8000, scoped, tag = 'output window, operand 0, single buffered']
    #allocation11 [shape = 'u8[4096]{0}', space=vmem, size = 0x1000, scoped, tag = 'output window, operand 1, single buffered']
    #allocation12 [shape = 's32[1]{0}', space=sflag, size = 0x4, scoped, tag = 'scoped memory for tpu_custom_call.1']
    %10 = vsyncpa [#allocation5], 0
    %11 = vsyncpa [#allocation8], 0
    %12 = vsyncpa [#allocation6], 0
    %13 = vsyncpa [#allocation12], 0
    // Predicated region
    $region2: #{tpu_custom_call.1} parent=1 // pred_check
      _
    $region3: #{tpu_custom_call.1} parent=1 // pred_check_branch
      %15 = sbr.rel (0) target = $region5
    $region4: #{tpu_custom_call.1} parent=1 // pred_region
      %s17 = ssub.s32 512, 512
      %18 = vsyncadd [#allocation5], %s17
      %s19 = sshll.u32 [#allocation4], 4
      %s20 = int_to_ptr.vmem [resolvable:$true] %s19
      %25 = dma.hbm_to_vmem [thread:$0]  %s0, 512, %s20, [#allocation5], 64, 64, 4
    $region5: #{tpu_custom_call.1} parent=1 // pred_fallthru
      _
    // Predicated region
    $region6: #{tpu_custom_call.1} parent=1 // pred_check
      _
    $region7: #{tpu_custom_call.1} parent=1 // pred_check_branch
      %27 = sbr.rel (0) target = $region9
    $region8: #{tpu_custom_call.1} parent=1 // pred_region
      %s29 = ssub.s32 3072, 3072
      %30 = vsyncadd [#allocation8], %s29
      %s31 = sshll.u32 [#allocation7], 4
      %s32 = int_to_ptr.vmem [resolvable:$true] %s31
      %37 = dma.hbm_to_vmem [thread:$0]  %s1, 3072, %s32, [#allocation8], 192, 192, 12
    $region9: #{tpu_custom_call.1} parent=1 // pred_fallthru
      _
    // Predicated region
    $region10: #{tpu_custom_call.1} parent=1 // pred_check
      _
    $region11: #{tpu_custom_call.1} parent=1 // pred_check_branch
      %39 = sbr.rel (0) target = $region13
    $region12: #{tpu_custom_call.1} parent=1 // pred_region
      %s41 = ssub.s32 3072, 3072
      %42 = vsyncadd [#allocation8], %s41
      %s43 = sshll.u32 [#allocation9], 4
      %s44 = int_to_ptr.vmem [resolvable:$true] %s43
      %49 = dma.hbm_to_vmem [thread:$0]  %s2, 3072, %s44, [#allocation8], 192, 192, 12
    $region13: #{tpu_custom_call.1} parent=1 // pred_fallthru
      _
    // Predicated region
    $region14: #{tpu_custom_call.1} parent=1 // pred_check
      _
    $region15: #{tpu_custom_call.1} parent=1 // pred_check_branch
      %51 = sbr.rel (0) target = $region17
    $region16: #{tpu_custom_call.1} parent=1 // pred_region
      %52 = dma.done [#allocation5], 512
    $region17: #{tpu_custom_call.1} parent=1 // pred_fallthru
      _
    // Predicated region
    $region18: #{tpu_custom_call.1} parent=1 // pred_check
      _
    $region19: #{tpu_custom_call.1} parent=1 // pred_check_branch
      %54 = sbr.rel (0) target = $region21
    $region20: #{tpu_custom_call.1} parent=1 // pred_region
      %55 = dma.done [#allocation8], 3072
    $region21: #{tpu_custom_call.1} parent=1 // pred_fallthru
      _
    // Predicated region
    $region22: #{tpu_custom_call.1} parent=1 // pred_check
      _
    $region23: #{tpu_custom_call.1} parent=1 // pred_check_branch
      %57 = sbr.rel (0) target = $region25
    $region24: #{tpu_custom_call.1} parent=1 // pred_region
      %58 = dma.done [#allocation8], 3072
    $region25: #{tpu_custom_call.1} parent=1 // pred_fallthru
      _
    %p60 = scmp.eq.s32.totalorder 0, 0
    // Predicated region
    $region26: #{tpu_custom_call.1} parent=1 // pred_check
      %p61 = pneg %p60
    $region27: #{tpu_custom_call.1} parent=1 // pred_check_branch
      %63 = sbr.rel (%p61) target = $region29
    $region28: #{tpu_custom_call.1} parent=1 // pred_region
      %64 = vst [vmem:[#allocation2] sm:$0xff] 0.0
    $region29: #{tpu_custom_call.1} parent=1 // pred_fallthru
      _
    %v65 = vld [vmem:[#allocation4] sm:$0xf]
    %v66 = vld [vmem:[#allocation4 + $0x4] sm:$0xf]
    %v67 = vld [vmem:[#allocation4 + $0x8] sm:$0xf]
    %v68 = vld [vmem:[#allocation4 + $0xc] sm:$0xf]
    %v69 = vld [vmem:[#allocation4 + $0x10] sm:$0xf]
    %v70 = vld [vmem:[#allocation4 + $0x14] sm:$0xf]
    %v71 = vld [vmem:[#allocation4 + $0x18] sm:$0xf]
    %v72 = vld [vmem:[#allocation4 + $0x1c] sm:$0xf]
    %v73 = vld [vmem:[#allocation7] sm:$0xff]
    %v74 = vld [vmem:[#allocation7 + $0x8] sm:$0xf]
    %v75 = vld [vmem:[#allocation7 + $0xc] sm:$0xff]
    %v76 = vld [vmem:[#allocation7 + $0x14] sm:$0xf]
    %v77 = vld [vmem:[#allocation7 + $0x18] sm:$0xff]
    %v78 = vld [vmem:[#allocation7 + $0x20] sm:$0xf]
    %v79 = vld [vmem:[#allocation7 + $0x24] sm:$0xff]
    %v80 = vld [vmem:[#allocation7 + $0x2c] sm:$0xf]
    %v81 = vld [vmem:[#allocation7 + $0x30] sm:$0xff]
    %v82 = vld [vmem:[#allocation7 + $0x38] sm:$0xf]
    %v83 = vld [vmem:[#allocation7 + $0x3c] sm:$0xff]
    %v84 = vld [vmem:[#allocation7 + $0x44] sm:$0xf]
    %v85 = vld [vmem:[#allocation7 + $0x48] sm:$0xff]
    %v86 = vld [vmem:[#allocation7 + $0x50] sm:$0xf]
    %v87 = vld [vmem:[#allocation7 + $0x54] sm:$0xff]
    %v88 = vld [vmem:[#allocation7 + $0x5c] sm:$0xf]
    %v89 = vld [vmem:[#allocation7 + $0x60] sm:$0xff]
    %v90 = vld [vmem:[#allocation7 + $0x68] sm:$0xf]
    %v91 = vld [vmem:[#allocation7 + $0x6c] sm:$0xff]
    %v92 = vld [vmem:[#allocation7 + $0x74] sm:$0xf]
    %v93 = vld [vmem:[#allocation7 + $0x78] sm:$0xff]
    %v94 = vld [vmem:[#allocation7 + $0x80] sm:$0xf]
    %v95 = vld [vmem:[#allocation7 + $0x84] sm:$0xff]
    %v96 = vld [vmem:[#allocation7 + $0x8c] sm:$0xf]
    %v97 = vld [vmem:[#allocation7 + $0x90] sm:$0xff]
    %v98 = vld [vmem:[#allocation7 + $0x98] sm:$0xf]
    %v99 = vld [vmem:[#allocation7 + $0x9c] sm:$0xff]
    %v100 = vld [vmem:[#allocation7 + $0xa4] sm:$0xf]
    %v101 = vld [vmem:[#allocation7 + $0xa8] sm:$0xff]
    %v102 = vld [vmem:[#allocation7 + $0xb0] sm:$0xf]
    %v103 = vld [vmem:[#allocation7 + $0xb4] sm:$0xff]
    %v104 = vld [vmem:[#allocation7 + $0xbc] sm:$0xf]
    %v113 = vunpack.c.l.b16 %v65
    %v114 = vunpack.c.l.b16 %v66
    %v115 = vunpack.c.l.b16 %v67
    %v116 = vunpack.c.l.b16 %v68
    %v117 = vunpack.c.l.b16 %v69
    %v118 = vunpack.c.l.b16 %v70
    %v119 = vunpack.c.l.b16 %v71
    %v120 = vunpack.c.l.b16 %v72
    %v121 = vpack.c.b16 %v114, %v113
    %v122 = vpack.c.b16 %v116, %v115
    %v123 = vpack.c.b16 %v118, %v117
    %v124 = vpack.c.b16 %v120, %v119
    %v161 = vunpack.c.l.b16 %v73
    %v162 = vunpack.c.h.b16 %v73
    %v163 = vunpack.c.l.b16 %v74
    %v164 = vunpack.c.l.b16 %v75
    %v165 = vunpack.c.h.b16 %v75
    %v166 = vunpack.c.l.b16 %v76
    %v167 = vunpack.c.l.b16 %v77
    %v168 = vunpack.c.h.b16 %v77
    %v169 = vunpack.c.l.b16 %v78
    %v170 = vunpack.c.l.b16 %v79
    %v171 = vunpack.c.h.b16 %v79
    %v172 = vunpack.c.l.b16 %v80
    %v173 = vunpack.c.l.b16 %v81
    %v174 = vunpack.c.h.b16 %v81
    %v175 = vunpack.c.l.b16 %v82
    %v176 = vunpack.c.l.b16 %v83
    %v177 = vunpack.c.h.b16 %v83
    %v178 = vunpack.c.l.b16 %v84
    %v179 = vunpack.c.l.b16 %v85
    %v180 = vunpack.c.h.b16 %v85
    %v181 = vunpack.c.l.b16 %v86
    %v182 = vunpack.c.l.b16 %v87
    %v183 = vunpack.c.h.b16 %v87
    %v184 = vunpack.c.l.b16 %v88
    %v185 = vunpack.c.l.b16 %v89
    %v186 = vunpack.c.h.b16 %v89
    %v187 = vunpack.c.l.b16 %v90
    %v188 = vunpack.c.l.b16 %v91
    %v189 = vunpack.c.h.b16 %v91
    %v190 = vunpack.c.l.b16 %v92
    %v191 = vunpack.c.l.b16 %v93
    %v192 = vunpack.c.h.b16 %v93
    %v193 = vunpack.c.l.b16 %v94
    %v194 = vunpack.c.l.b16 %v95
    %v195 = vunpack.c.h.b16 %v95
    %v196 = vunpack.c.l.b16 %v96
    %v197 = vunpack.c.l.b16 %v97
    %v198 = vunpack.c.h.b16 %v97
    %v199 = vunpack.c.l.b16 %v98
    %v200 = vunpack.c.l.b16 %v99
    %v201 = vunpack.c.h.b16 %v99
    %v202 = vunpack.c.l.b16 %v100
    %v203 = vunpack.c.l.b16 %v101
    %v204 = vunpack.c.h.b16 %v101
    %v205 = vunpack.c.l.b16 %v102
    %v206 = vunpack.c.l.b16 %v103
    %v207 = vunpack.c.h.b16 %v103
    %v208 = vunpack.c.l.b16 %v104
    %v209 = vpack.c.b16 %v164, %v161
    %v210 = vpack.c.b16 %v165, %v162
    %v211 = vpack.c.b16 %v166, %v163
    %v212 = vpack.c.b16 %v170, %v167
    %v213 = vpack.c.b16 %v171, %v168
    %v214 = vpack.c.b16 %v172, %v169
    %v215 = vpack.c.b16 %v176, %v173
    %v216 = vpack.c.b16 %v177, %v174
    %v217 = vpack.c.b16 %v178, %v175
    %v218 = vpack.c.b16 %v182, %v179
    %v219 = vpack.c.b16 %v183, %v180
    %v220 = vpack.c.b16 %v184, %v181
    %v221 = vpack.c.b16 %v188, %v185
    %v222 = vpack.c.b16 %v189, %v186
    %v223 = vpack.c.b16 %v190, %v187
    %v224 = vpack.c.b16 %v194, %v191
    %v225 = vpack.c.b16 %v195, %v192
    %v226 = vpack.c.b16 %v196, %v193
    %v227 = vpack.c.b16 %v200, %v197
    %v228 = vpack.c.b16 %v201, %v198
    %v229 = vpack.c.b16 %v202, %v199
    %v230 = vpack.c.b16 %v206, %v203
    %v231 = vpack.c.b16 %v207, %v204
    %v232 = vpack.c.b16 %v208, %v205
    %257 = vmatprep.subr.bf16.mxu0 %v210
    %258 = vmatpush1.bf16.msra.mxu0 %v209
    %259 = vmatprep.subr.bf16.mxu0 %v213
    %260 = vmatpush1.bf16.msra.mxu0 %v212
    %261 = vmatprep.subr.bf16.mxu0 %v216
    %262 = vmatpush1.bf16.msra.mxu0 %v215
    %263 = vmatprep.subr.bf16.mxu0 %v219
    %264 = vmatpush1.bf16.msra.mxu0 %v218
    %265 = vmatprep.subr.bf16.mxu0 %v222
    %266 = vmatpush1.bf16.msra.mxu0 %v221
    %267 = vmatprep.subr.bf16.mxu0 %v225
    %268 = vmatpush1.bf16.msra.mxu0 %v224
    %269 = vmatprep.subr.bf16.mxu0 %v228
    %270 = vmatpush1.bf16.msra.mxu0 %v227
    %271 = vmatprep.subr.bf16.mxu0 %v231
    %272 = vmatpush1.bf16.msra.mxu0 %v230
    %273 = vmatprep.subr.bf16.mxu0 0
    %274 = vmatpush1.bf16.msra.mxu0 0
    %275 = vmatprep.subr.bf16.mxu0 0
    %276 = vmatpush1.bf16.msra.mxu0 0
    %277 = vmatprep.subr.bf16.mxu0 0
    %278 = vmatpush1.bf16.msra.mxu0 0
    %279 = vmatprep.subr.bf16.mxu0 0
    %280 = vmatpush1.bf16.msra.mxu0 0
    %281 = vmatprep.subr.bf16.mxu0 0
    %282 = vmatpush1.bf16.msra.mxu0 0
    %283 = vmatprep.subr.bf16.mxu0 0
    %284 = vmatpush1.bf16.msra.mxu0 0
    %285 = vmatprep.subr.bf16.mxu0 0
    %286 = vmatpush1.bf16.msra.mxu0 0
    %287 = vmatprep.subr.bf16.mxu0 0
    %288 = vmatpush1.bf16.msra.mxu0 0
    %289 = vmatprep.mubr.bf16.mxu0 0
    %290 = vmatmul.mubr.bf16.gmra.mrb[0].mxu0 %v121
    %v291 = vpop.f32.mrb[0].mxu0
    %v292 = vadd.f32 0.0, %v291
    %v293 = vpop.f32.mrb[0].mxu0
    %v294 = vadd.f32 0.0, %v293
    %v295 = vpop.f32.mrb[0].mxu0
    %v296 = vadd.f32 0.0, %v295
    %v297 = vpop.f32.mrb[0].mxu0
    %v298 = vadd.f32 0.0, %v297
    %299 = vmatprep.mubr.bf16.mxu0 0
    %300 = vmatmul.mubr.bf16.gmra.mrb[0].mxu0 %v122
    %v301 = vpop.f32.mrb[0].mxu0
    %v302 = vadd.f32 0.0, %v301
    %v303 = vpop.f32.mrb[0].mxu0
    %v304 = vadd.f32 0.0, %v303
    %v305 = vpop.f32.mrb[0].mxu0
    %v306 = vadd.f32 0.0, %v305
    %v307 = vpop.f32.mrb[0].mxu0
    %v308 = vadd.f32 0.0, %v307
    %309 = vmatprep.mubr.bf16.mxu0 0
    %310 = vmatmul.mubr.bf16.gmra.mrb[0].mxu0 %v123
    %v311 = vpop.f32.mrb[0].mxu0
    %v312 = vadd.f32 0.0, %v311
    %v313 = vpop.f32.mrb[0].mxu0
    %v314 = vadd.f32 0.0, %v313
    %v315 = vpop.f32.mrb[0].mxu0
    %v316 = vadd.f32 0.0, %v315
    %v317 = vpop.f32.mrb[0].mxu0
    %v318 = vadd.f32 0.0, %v317
    %319 = vmatprep.mubr.bf16.mxu0 0
    %320 = vmatmul.mubr.bf16.gmra.mrb[0].mxu0 %v124
    %v321 = vpop.f32.mrb[0].mxu0
    %v322 = vadd.f32 0.0, %v321
    %v323 = vpop.f32.mrb[0].mxu0
    %v324 = vadd.f32 0.0, %v323
    %v325 = vpop.f32.mrb[0].mxu0
    %v326 = vadd.f32 0.0, %v325
    %v327 = vpop.f32.mrb[0].mxu0
    %v328 = vadd.f32 0.0, %v327
    %329 = vdwg.mxu0
    %330 = vmatprep.subr.bf16.mxu0 0
    %331 = vmatpush1.bf16.msra.mxu0 %v211
    %332 = vmatprep.subr.bf16.mxu0 0
    %333 = vmatpush1.bf16.msra.mxu0 %v214
    %334 = vmatprep.subr.bf16.mxu0 0
    %335 = vmatpush1.bf16.msra.mxu0 %v217
    %336 = vmatprep.subr.bf16.mxu0 0
    %337 = vmatpush1.bf16.msra.mxu0 %v220
    %338 = vmatprep.subr.bf16.mxu0 0
    %339 = vmatpush1.bf16.msra.mxu0 %v223
    %340 = vmatprep.subr.bf16.mxu0 0
    %341 = vmatpush1.bf16.msra.mxu0 %v226
    %342 = vmatprep.subr.bf16.mxu0 0
    %343 = vmatpush1.bf16.msra.mxu0 %v229
    %344 = vmatprep.subr.bf16.mxu0 0
    %345 = vmatpush1.bf16.msra.mxu0 %v232
    %346 = vmatprep.subr.bf16.mxu0 0
    %347 = vmatpush1.bf16.msra.mxu0 0
    %348 = vmatprep.subr.bf16.mxu0 0
    %349 = vmatpush1.bf16.msra.mxu0 0
    %350 = vmatprep.subr.bf16.mxu0 0
    %351 = vmatpush1.bf16.msra.mxu0 0
    %352 = vmatprep.subr.bf16.mxu0 0
    %353 = vmatpush1.bf16.msra.mxu0 0
    %354 = vmatprep.subr.bf16.mxu0 0
    %355 = vmatpush1.bf16.msra.mxu0 0
    %356 = vmatprep.subr.bf16.mxu0 0
    %357 = vmatpush1.bf16.msra.mxu0 0
    %358 = vmatprep.subr.bf16.mxu0 0
    %359 = vmatpush1.bf16.msra.mxu0 0
    %360 = vmatprep.subr.bf16.mxu0 0
    %361 = vmatpush1.bf16.msra.mxu0 0
    %362 = vmatprep.mubr.bf16.mxu0 0
    %363 = vmatmul.mubr.bf16.gmra.mrb[0].mxu0 %v121
    %v364 = vpop.f32.mrb[0].mxu0
    %v365 = vadd.f32 0.0, %v364
    %v366 = vpop.f32.mrb[0].mxu0
    %v367 = vpop.f32.mrb[0].mxu0
    %v368 = vadd.f32 0.0, %v367
    %v369 = vpop.f32.mrb[0].mxu0
    %370 = vmatprep.mubr.bf16.mxu0 0
    %371 = vmatmul.mubr.bf16.gmra.mrb[0].mxu0 %v122
    %v372 = vpop.f32.mrb[0].mxu0
    %v373 = vadd.f32 0.0, %v372
    %v374 = vpop.f32.mrb[0].mxu0
    %v375 = vpop.f32.mrb[0].mxu0
    %v376 = vadd.f32 0.0, %v375
    %v377 = vpop.f32.mrb[0].mxu0
    %378 = vmatprep.mubr.bf16.mxu0 0
    %379 = vmatmul.mubr.bf16.gmra.mrb[0].mxu0 %v123
    %v380 = vpop.f32.mrb[0].mxu0
    %v381 = vadd.f32 0.0, %v380
    %v382 = vpop.f32.mrb[0].mxu0
    %v383 = vpop.f32.mrb[0].mxu0
    %v384 = vadd.f32 0.0, %v383
    %v385 = vpop.f32.mrb[0].mxu0
    %386 = vmatprep.mubr.bf16.mxu0 0
    %387 = vmatmul.mubr.bf16.gmra.mrb[0].mxu0 %v124
    %v388 = vpop.f32.mrb[0].mxu0
    %v389 = vadd.f32 0.0, %v388
    %v390 = vpop.f32.mrb[0].mxu0
    %v391 = vpop.f32.mrb[0].mxu0
    %v392 = vadd.f32 0.0, %v391
    %v393 = vpop.f32.mrb[0].mxu0
    %394 = vdwg.mxu0
    %395 = vst [vmem:[#allocation3] sm:$0xff] %v292
    %396 = vst [vmem:[#allocation3 + $0x8] sm:$0xff] %v294
    %397 = vst [vmem:[#allocation3 + $0x10] sm:$0xff] %v365
    %398 = vst [vmem:[#allocation3 + $0x18] sm:$0xff] %v296
    %399 = vst [vmem:[#allocation3 + $0x20] sm:$0xff] %v298
    %400 = vst [vmem:[#allocation3 + $0x28] sm:$0xff] %v368
    %401 = vst [vmem:[#allocation3 + $0x30] sm:$0xff] %v302
    %402 = vst [vmem:[#allocation3 + $0x38] sm:$0xff] %v304
    %403 = vst [vmem:[#allocation3 + $0x40] sm:$0xff] %v373
    %404 = vst [vmem:[#allocation3 + $0x48] sm:$0xff] %v306
    %405 = vst [vmem:[#allocation3 + $0x50] sm:$0xff] %v308
    %406 = vst [vmem:[#allocation3 + $0x58] sm:$0xff] %v376
    %407 = vst [vmem:[#allocation3 + $0x60] sm:$0xff] %v312
    %408 = vst [vmem:[#allocation3 + $0x68] sm:$0xff] %v314
    %409 = vst [vmem:[#allocation3 + $0x70] sm:$0xff] %v381
    %410 = vst [vmem:[#allocation3 + $0x78] sm:$0xff] %v316
    %411 = vst [vmem:[#allocation3 + $0x80] sm:$0xff] %v318
    %412 = vst [vmem:[#allocation3 + $0x88] sm:$0xff] %v384
    %413 = vst [vmem:[#allocation3 + $0x90] sm:$0xff] %v322
    %414 = vst [vmem:[#allocation3 + $0x98] sm:$0xff] %v324
    %415 = vst [vmem:[#allocation3 + $0xa0] sm:$0xff] %v389
    %416 = vst [vmem:[#allocation3 + $0xa8] sm:$0xff] %v326
    %417 = vst [vmem:[#allocation3 + $0xb0] sm:$0xff] %v328
    %418 = vst [vmem:[#allocation3 + $0xb8] sm:$0xff] %v392
    %v419 = vld [vmem:[#allocation9] sm:$0xff]
    %v420 = vld [vmem:[#allocation9 + $0x8] sm:$0xf]
    %v421 = vld [vmem:[#allocation9 + $0xc] sm:$0xff]
    %v422 = vld [vmem:[#allocation9 + $0x14] sm:$0xf]
    %v423 = vld [vmem:[#allocation9 + $0x18] sm:$0xff]
    %v424 = vld [vmem:[#allocation9 + $0x20] sm:$0xf]
    %v425 = vld [vmem:[#allocation9 + $0x24] sm:$0xff]
    %v426 = vld [vmem:[#allocation9 + $0x2c] sm:$0xf]
    %v427 = vld [vmem:[#allocation9 + $0x30] sm:$0xff]
    %v428 = vld [vmem:[#allocation9 + $0x38] sm:$0xf]
    %v429 = vld [vmem:[#allocation9 + $0x3c] sm:$0xff]
    %v430 = vld [vmem:[#allocation9 + $0x44] sm:$0xf]
    %v431 = vld [vmem:[#allocation9 + $0x48] sm:$0xff]
    %v432 = vld [vmem:[#allocation9 + $0x50] sm:$0xf]
    %v433 = vld [vmem:[#allocation9 + $0x54] sm:$0xff]
    %v434 = vld [vmem:[#allocation9 + $0x5c] sm:$0xf]
    %v435 = vld [vmem:[#allocation9 + $0x60] sm:$0xff]
    %v436 = vld [vmem:[#allocation9 + $0x68] sm:$0xf]
    %v437 = vld [vmem:[#allocation9 + $0x6c] sm:$0xff]
    %v438 = vld [vmem:[#allocation9 + $0x74] sm:$0xf]
    %v439 = vld [vmem:[#allocation9 + $0x78] sm:$0xff]
    %v440 = vld [vmem:[#allocation9 + $0x80] sm:$0xf]
    %v441 = vld [vmem:[#allocation9 + $0x84] sm:$0xff]
    %v442 = vld [vmem:[#allocation9 + $0x8c] sm:$0xf]
    %v443 = vld [vmem:[#allocation9 + $0x90] sm:$0xff]
    %v444 = vld [vmem:[#allocation9 + $0x98] sm:$0xf]
    %v445 = vld [vmem:[#allocation9 + $0x9c] sm:$0xff]
    %v446 = vld [vmem:[#allocation9 + $0xa4] sm:$0xf]
    %v447 = vld [vmem:[#allocation9 + $0xa8] sm:$0xff]
    %v448 = vld [vmem:[#allocation9 + $0xb0] sm:$0xf]
    %v449 = vld [vmem:[#allocation9 + $0xb4] sm:$0xff]
    %v450 = vld [vmem:[#allocation9 + $0xbc] sm:$0xf]
    %v451 = vld [vmem:[#allocation2] sm:$0xff]
    loop: start=0, step=1, limit=2
    $region30: #{tpu_custom_call.1} parent=1 // loop_pre_header
      _
    $region31: #{tpu_custom_call.1} parent=1 // loop_header
      %s453 = sphi 0, %s457
      %p454 = scmp.ge.s32.totalorder %s453, 2
      %v458 = vphi %v451, %v1044
    $region32: #{tpu_custom_call.1} parent=1 // loop_header_branch
      %456 = sbr.rel (%p454) target = $region36
    $region33: #{tpu_custom_call.1} parent=1 // loop_body
      %s459 = smul.u32 %s453, 32
      %s460 = sshra.s32 %s459, 3
      %s461 = sand.u32 %s459, 7
      %s462 = smul.u32 %s460, 3
      %s463 = smul.addr %s462, 8
      %s464 = scalar_lea.vmem [#allocation3], %s463
      %v465 = vld [vmem:[%s464] sm:$0xff]
      %v466 = vld [vmem:[%s464 + $0x8] sm:$0xff]
      %v467 = vld [vmem:[%s464 + $0x10] sm:$0xff]
      %v468 = vpack.c.bf16 %v458, %v458
      %v501 = vunpack.c.l.b16 %v419
      %v502 = vunpack.c.h.b16 %v419
      %v503 = vunpack.c.l.b16 %v420
      %v504 = vunpack.c.l.b16 %v421
      %v505 = vunpack.c.h.b16 %v421
      %v506 = vunpack.c.l.b16 %v422
      %v507 = vunpack.c.l.b16 %v423
      %v508 = vunpack.c.h.b16 %v423
      %v509 = vunpack.c.l.b16 %v424
      %v510 = vunpack.c.l.b16 %v425
      %v511 = vunpack.c.h.b16 %v425
      %v512 = vunpack.c.l.b16 %v426
      %v513 = vunpack.c.l.b16 %v427
      %v514 = vunpack.c.h.b16 %v427
      %v515 = vunpack.c.l.b16 %v428
      %v516 = vunpack.c.l.b16 %v429
      %v517 = vunpack.c.h.b16 %v429
      %v518 = vunpack.c.l.b16 %v430
      %v519 = vunpack.c.l.b16 %v431
      %v520 = vunpack.c.h.b16 %v431
      %v521 = vunpack.c.l.b16 %v432
      %v522 = vunpack.c.l.b16 %v433
      %v523 = vunpack.c.h.b16 %v433
      %v524 = vunpack.c.l.b16 %v434
      %v525 = vunpack.c.l.b16 %v435
      %v526 = vunpack.c.h.b16 %v435
      %v527 = vunpack.c.l.b16 %v436
      %v528 = vunpack.c.l.b16 %v437
      %v529 = vunpack.c.h.b16 %v437
      %v530 = vunpack.c.l.b16 %v438
      %v531 = vunpack.c.l.b16 %v439
      %v532 = vunpack.c.h.b16 %v439
      %v533 = vunpack.c.l.b16 %v440
      %v534 = vunpack.c.l.b16 %v441
      %v535 = vunpack.c.h.b16 %v441
      %v536 = vunpack.c.l.b16 %v442
      %v537 = vunpack.c.l.b16 %v443
      %v538 = vunpack.c.h.b16 %v443
      %v539 = vunpack.c.l.b16 %v444
      %v540 = vunpack.c.l.b16 %v445
      %v541 = vunpack.c.h.b16 %v445
      %v542 = vunpack.c.l.b16 %v446
      %v543 = vunpack.c.l.b16 %v447
      %v544 = vunpack.c.h.b16 %v447
      %v545 = vunpack.c.l.b16 %v448
      %v546 = vunpack.c.l.b16 %v449
      %v547 = vunpack.c.h.b16 %v449
      %v548 = vunpack.c.l.b16 %v450
      %v549 = vpack.c.b16 %v504, %v501
      %v550 = vpack.c.b16 %v505, %v502
      %v551 = vpack.c.b16 %v506, %v503
      %v552 = vpack.c.b16 %v510, %v507
      %v553 = vpack.c.b16 %v511, %v508
      %v554 = vpack.c.b16 %v512, %v509
      %v555 = vpack.c.b16 %v516, %v513
      %v556 = vpack.c.b16 %v517, %v514
      %v557 = vpack.c.b16 %v518, %v515
      %v558 = vpack.c.b16 %v522, %v519
      %v559 = vpack.c.b16 %v523, %v520
      %v560 = vpack.c.b16 %v524, %v521
      %v561 = vpack.c.b16 %v528, %v525
      %v562 = vpack.c.b16 %v529, %v526
      %v563 = vpack.c.b16 %v530, %v527
      %v564 = vpack.c.b16 %v534, %v531
      %v565 = vpack.c.b16 %v535, %v532
      %v566 = vpack.c.b16 %v536, %v533
      %v567 = vpack.c.b16 %v540, %v537
      %v568 = vpack.c.b16 %v541, %v538
      %v569 = vpack.c.b16 %v542, %v539
      %v570 = vpack.c.b16 %v546, %v543
      %v571 = vpack.c.b16 %v547, %v544
      %v572 = vpack.c.b16 %v548, %v545
      %597 = vmatprep.subr.bf16.mxu0 %v550
      %598 = vmatpush1.bf16.msra.mxu0 %v549
      %599 = vmatprep.subr.bf16.mxu0 %v553
      %600 = vmatpush1.bf16.msra.mxu0 %v552
      %601 = vmatprep.subr.bf16.mxu0 %v556
      %602 = vmatpush1.bf16.msra.mxu0 %v555
      %603 = vmatprep.subr.bf16.mxu0 %v559
      %604 = vmatpush1.bf16.msra.mxu0 %v558
      %605 = vmatprep.subr.bf16.mxu0 %v562
      %606 = vmatpush1.bf16.msra.mxu0 %v561
      %607 = vmatprep.subr.bf16.mxu0 %v565
      %608 = vmatpush1.bf16.msra.mxu0 %v564
      %609 = vmatprep.subr.bf16.mxu0 %v568
      %610 = vmatpush1.bf16.msra.mxu0 %v567
      %611 = vmatprep.subr.bf16.mxu0 %v571
      %612 = vmatpush1.bf16.msra.mxu0 %v570
      %613 = vmatprep.subr.bf16.mxu0 0
      %614 = vmatpush1.bf16.msra.mxu0 0
      %615 = vmatprep.subr.bf16.mxu0 0
      %616 = vmatpush1.bf16.msra.mxu0 0
      %617 = vmatprep.subr.bf16.mxu0 0
      %618 = vmatpush1.bf16.msra.mxu0 0
      %619 = vmatprep.subr.bf16.mxu0 0
      %620 = vmatpush1.bf16.msra.mxu0 0
      %621 = vmatprep.subr.bf16.mxu0 0
      %622 = vmatpush1.bf16.msra.mxu0 0
      %623 = vmatprep.subr.bf16.mxu0 0
      %624 = vmatpush1.bf16.msra.mxu0 0
      %625 = vmatprep.subr.bf16.mxu0 0
      %626 = vmatpush1.bf16.msra.mxu0 0
      %627 = vmatprep.subr.bf16.mxu0 0
      %628 = vmatpush1.bf16.msra.mxu0 0
      %629 = vmatprep.mubr.bf16.mxu0 0
      %630 = vmatmul.mubr.bf16.gmra.mrb[0].mxu0 %v468
      %v631 = vpop.f32.mrb[0].mxu0
      %v632 = vadd.f32 0.0, %v631
      %v633 = vpop.f32.mrb[0].mxu0
      %v634 = vadd.f32 0.0, %v633
      %v635 = vpop.f32.mrb[0].mxu0
      %v636 = vpop.f32.mrb[0].mxu0
      %637 = vdwg.mxu0
      %638 = vmatprep.subr.bf16.mxu0 0
      %639 = vmatpush1.bf16.msra.mxu0 %v551
      %640 = vmatprep.subr.bf16.mxu0 0
      %641 = vmatpush1.bf16.msra.mxu0 %v554
      %642 = vmatprep.subr.bf16.mxu0 0
      %643 = vmatpush1.bf16.msra.mxu0 %v557
      %644 = vmatprep.subr.bf16.mxu0 0
      %645 = vmatpush1.bf16.msra.mxu0 %v560
      %646 = vmatprep.subr.bf16.mxu0 0
      %647 = vmatpush1.bf16.msra.mxu0 %v563
      %648 = vmatprep.subr.bf16.mxu0 0
      %649 = vmatpush1.bf16.msra.mxu0 %v566
      %650 = vmatprep.subr.bf16.mxu0 0
      %651 = vmatpush1.bf16.msra.mxu0 %v569
      %652 = vmatprep.subr.bf16.mxu0 0
      %653 = vmatpush1.bf16.msra.mxu0 %v572
      %654 = vmatprep.subr.bf16.mxu0 0
      %655 = vmatpush1.bf16.msra.mxu0 0
      %656 = vmatprep.subr.bf16.mxu0 0
      %657 = vmatpush1.bf16.msra.mxu0 0
      %658 = vmatprep.subr.bf16.mxu0 0
      %659 = vmatpush1.bf16.msra.mxu0 0
      %660 = vmatprep.subr.bf16.mxu0 0
      %661 = vmatpush1.bf16.msra.mxu0 0
      %662 = vmatprep.subr.bf16.mxu0 0
      %663 = vmatpush1.bf16.msra.mxu0 0
      %664 = vmatprep.subr.bf16.mxu0 0
      %665 = vmatpush1.bf16.msra.mxu0 0
      %666 = vmatprep.subr.bf16.mxu0 0
      %667 = vmatpush1.bf16.msra.mxu0 0
      %668 = vmatprep.subr.bf16.mxu0 0
      %669 = vmatpush1.bf16.msra.mxu0 0
      %670 = vmatprep.mubr.bf16.mxu0 0
      %671 = vmatmul.mubr.bf16.gmra.mrb[0].mxu0 %v468
      %v672 = vpop.f32.mrb[0].mxu0
      %v673 = vadd.f32 0.0, %v672
      %v674 = vpop.f32.mrb[0].mxu0
      %v675 = vpop.f32.mrb[0].mxu0
      %v676 = vpop.f32.mrb[0].mxu0
      %677 = vdwg.mxu0
      %v678 = vadd.f32 %v465, %v632
      %v679 = vxor.u32 %v678, 2147483648
      %v680 = vmul.f32 %v679, 1.442695
      %v681 = vpow.pop %v680
      %v682 = vadd.f32 %v681, 1.0
      %v683 = vrcp.pop %v682
      %v684 = vmul.f32 1.0, %v683
      %v685 = vadd.f32 %v466, %v634
      %v686 = vxor.u32 %v685, 2147483648
      %v687 = vmul.f32 %v686, 1.442695
      %v688 = vpow.pop %v687
      %v689 = vadd.f32 %v688, 1.0
      %v690 = vrcp.pop %v689
      %v691 = vmul.f32 1.0, %v690
      %v692 = vmul.f32 %v684, %v673
      %v693 = vadd.f32 %v467, %v692
      %v694 = vtanh.pop %v693
      %v695 = vsub.f32 1.0, %v691
      %v696 = vmul.f32 %v695, %v694
      %v697 = vmul.f32 %v691, %v458
      %v698 = vadd.f32 %v696, %v697
      %s699 = scalar_lea.vmem [#allocation10], %s459
      %700 = vst [vmem:[%s699] sm:$0xff] %v698
      %s701 = smul.u32 %s453, 4
      %s702 = sadd.s32 %s701, 1
      %s703 = smul.u32 %s702, 8
      %s704 = sshra.s32 %s703, 3
      %s705 = sand.u32 %s703, 7
      %s706 = smul.u32 %s704, 3
      %s707 = smul.addr %s706, 8
      %s708 = scalar_lea.vmem [#allocation3], %s707
      %v709 = vld [vmem:[%s708] sm:$0xff]
      %v710 = vld [vmem:[%s708 + $0x8] sm:$0xff]
      %v711 = vld [vmem:[%s708 + $0x10] sm:$0xff]
      %v712 = vpack.c.bf16 %v698, %v698
      %713 = vmatprep.subr.bf16.mxu0 %v550
      %714 = vmatpush1.bf16.msra.mxu0 %v549
      %715 = vmatprep.subr.bf16.mxu0 %v553
      %716 = vmatpush1.bf16.msra.mxu0 %v552
      %717 = vmatprep.subr.bf16.mxu0 %v556
      %718 = vmatpush1.bf16.msra.mxu0 %v555
      %719 = vmatprep.subr.bf16.mxu0 %v559
      %720 = vmatpush1.bf16.msra.mxu0 %v558
      %721 = vmatprep.subr.bf16.mxu0 %v562
      %722 = vmatpush1.bf16.msra.mxu0 %v561
      %723 = vmatprep.subr.bf16.mxu0 %v565
      %724 = vmatpush1.bf16.msra.mxu0 %v564
      %725 = vmatprep.subr.bf16.mxu0 %v568
      %726 = vmatpush1.bf16.msra.mxu0 %v567
      %727 = vmatprep.subr.bf16.mxu0 %v571
      %728 = vmatpush1.bf16.msra.mxu0 %v570
      %729 = vmatprep.subr.bf16.mxu0 0
      %730 = vmatpush1.bf16.msra.mxu0 0
      %731 = vmatprep.subr.bf16.mxu0 0
      %732 = vmatpush1.bf16.msra.mxu0 0
      %733 = vmatprep.subr.bf16.mxu0 0
      %734 = vmatpush1.bf16.msra.mxu0 0
      %735 = vmatprep.subr.bf16.mxu0 0
      %736 = vmatpush1.bf16.msra.mxu0 0
      %737 = vmatprep.subr.bf16.mxu0 0
      %738 = vmatpush1.bf16.msra.mxu0 0
      %739 = vmatprep.subr.bf16.mxu0 0
      %740 = vmatpush1.bf16.msra.mxu0 0
      %741 = vmatprep.subr.bf16.mxu0 0
      %742 = vmatpush1.bf16.msra.mxu0 0
      %743 = vmatprep.subr.bf16.mxu0 0
      %744 = vmatpush1.bf16.msra.mxu0 0
      %745 = vmatprep.mubr.bf16.mxu0 0
      %746 = vmatmul.mubr.bf16.gmra.mrb[0].mxu0 %v712
      %v747 = vpop.f32.mrb[0].mxu0
      %v748 = vadd.f32 0.0, %v747
      %v749 = vpop.f32.mrb[0].mxu0
      %v750 = vadd.f32 0.0, %v749
      %v751 = vpop.f32.mrb[0].mxu0
      %v752 = vpop.f32.mrb[0].mxu0
      %753 = vdwg.mxu0
      %754 = vmatprep.subr.bf16.mxu0 0
      %755 = vmatpush1.bf16.msra.mxu0 %v551
      %756 = vmatprep.subr.bf16.mxu0 0
      %757 = vmatpush1.bf16.msra.mxu0 %v554
      %758 = vmatprep.subr.bf16.mxu0 0
      %759 = vmatpush1.bf16.msra.mxu0 %v557
      %760 = vmatprep.subr.bf16.mxu0 0
      %761 = vmatpush1.bf16.msra.mxu0 %v560
      %762 = vmatprep.subr.bf16.mxu0 0
      %763 = vmatpush1.bf16.msra.mxu0 %v563
      %764 = vmatprep.subr.bf16.mxu0 0
      %765 = vmatpush1.bf16.msra.mxu0 %v566
      %766 = vmatprep.subr.bf16.mxu0 0
      %767 = vmatpush1.bf16.msra.mxu0 %v569
      %768 = vmatprep.subr.bf16.mxu0 0
      %769 = vmatpush1.bf16.msra.mxu0 %v572
      %770 = vmatprep.subr.bf16.mxu0 0
      %771 = vmatpush1.bf16.msra.mxu0 0
      %772 = vmatprep.subr.bf16.mxu0 0
      %773 = vmatpush1.bf16.msra.mxu0 0
      %774 = vmatprep.subr.bf16.mxu0 0
      %775 = vmatpush1.bf16.msra.mxu0 0
      %776 = vmatprep.subr.bf16.mxu0 0
      %777 = vmatpush1.bf16.msra.mxu0 0
      %778 = vmatprep.subr.bf16.mxu0 0
      %779 = vmatpush1.bf16.msra.mxu0 0
      %780 = vmatprep.subr.bf16.mxu0 0
      %781 = vmatpush1.bf16.msra.mxu0 0
      %782 = vmatprep.subr.bf16.mxu0 0
      %783 = vmatpush1.bf16.msra.mxu0 0
      %784 = vmatprep.subr.bf16.mxu0 0
      %785 = vmatpush1.bf16.msra.mxu0 0
      %786 = vmatprep.mubr.bf16.mxu0 0
      %787 = vmatmul.mubr.bf16.gmra.mrb[0].mxu0 %v712
      %v788 = vpop.f32.mrb[0].mxu0
      %v789 = vadd.f32 0.0, %v788
      %v790 = vpop.f32.mrb[0].mxu0
      %v791 = vpop.f32.mrb[0].mxu0
      %v792 = vpop.f32.mrb[0].mxu0
      %793 = vdwg.mxu0
      %v794 = vadd.f32 %v709, %v748
      %v795 = vxor.u32 %v794, 2147483648
      %v796 = vmul.f32 %v795, 1.442695
      %v797 = vpow.pop %v796
      %v798 = vadd.f32 %v797, 1.0
      %v799 = vrcp.pop %v798
      %v800 = vmul.f32 1.0, %v799
      %v801 = vadd.f32 %v710, %v750
      %v802 = vxor.u32 %v801, 2147483648
      %v803 = vmul.f32 %v802, 1.442695
      %v804 = vpow.pop %v803
      %v805 = vadd.f32 %v804, 1.0
      %v806 = vrcp.pop %v805
      %v807 = vmul.f32 1.0, %v806
      %v808 = vmul.f32 %v800, %v789
      %v809 = vadd.f32 %v711, %v808
      %v810 = vtanh.pop %v809
      %v811 = vsub.f32 1.0, %v807
      %v812 = vmul.f32 %v811, %v810
      %v813 = vmul.f32 %v807, %v698
      %v814 = vadd.f32 %v812, %v813
      %s815 = scalar_lea.vmem [#allocation10], %s703
      %816 = vst [vmem:[%s815] sm:$0xff] %v814
      %s817 = sadd.s32 %s701, 2
      %s818 = smul.u32 %s817, 8
      %s819 = sshra.s32 %s818, 3
      %s820 = sand.u32 %s818, 7
      %s821 = smul.u32 %s819, 3
      %s822 = smul.addr %s821, 8
      %s823 = scalar_lea.vmem [#allocation3], %s822
      %v824 = vld [vmem:[%s823] sm:$0xff]
      %v825 = vld [vmem:[%s823 + $0x8] sm:$0xff]
      %v826 = vld [vmem:[%s823 + $0x10] sm:$0xff]
      %v827 = vpack.c.bf16 %v814, %v814
      %828 = vmatprep.subr.bf16.mxu0 %v550
      %829 = vmatpush1.bf16.msra.mxu0 %v549
      %830 = vmatprep.subr.bf16.mxu0 %v553
      %831 = vmatpush1.bf16.msra.mxu0 %v552
      %832 = vmatprep.subr.bf16.mxu0 %v556
      %833 = vmatpush1.bf16.msra.mxu0 %v555
      %834 = vmatprep.subr.bf16.mxu0 %v559
      %835 = vmatpush1.bf16.msra.mxu0 %v558
      %836 = vmatprep.subr.bf16.mxu0 %v562
      %837 = vmatpush1.bf16.msra.mxu0 %v561
      %838 = vmatprep.subr.bf16.mxu0 %v565
      %839 = vmatpush1.bf16.msra.mxu0 %v564
      %840 = vmatprep.subr.bf16.mxu0 %v568
      %841 = vmatpush1.bf16.msra.mxu0 %v567
      %842 = vmatprep.subr.bf16.mxu0 %v571
      %843 = vmatpush1.bf16.msra.mxu0 %v570
      %844 = vmatprep.subr.bf16.mxu0 0
      %845 = vmatpush1.bf16.msra.mxu0 0
      %846 = vmatprep.subr.bf16.mxu0 0
      %847 = vmatpush1.bf16.msra.mxu0 0
      %848 = vmatprep.subr.bf16.mxu0 0
      %849 = vmatpush1.bf16.msra.mxu0 0
      %850 = vmatprep.subr.bf16.mxu0 0
      %851 = vmatpush1.bf16.msra.mxu0 0
      %852 = vmatprep.subr.bf16.mxu0 0
      %853 = vmatpush1.bf16.msra.mxu0 0
      %854 = vmatprep.subr.bf16.mxu0 0
      %855 = vmatpush1.bf16.msra.mxu0 0
      %856 = vmatprep.subr.bf16.mxu0 0
      %857 = vmatpush1.bf16.msra.mxu0 0
      %858 = vmatprep.subr.bf16.mxu0 0
      %859 = vmatpush1.bf16.msra.mxu0 0
      %860 = vmatprep.mubr.bf16.mxu0 0
      %861 = vmatmul.mubr.bf16.gmra.mrb[0].mxu0 %v827
      %v862 = vpop.f32.mrb[0].mxu0
      %v863 = vadd.f32 0.0, %v862
      %v864 = vpop.f32.mrb[0].mxu0
      %v865 = vadd.f32 0.0, %v864
      %v866 = vpop.f32.mrb[0].mxu0
      %v867 = vpop.f32.mrb[0].mxu0
      %868 = vdwg.mxu0
      %869 = vmatprep.subr.bf16.mxu0 0
      %870 = vmatpush1.bf16.msra.mxu0 %v551
      %871 = vmatprep.subr.bf16.mxu0 0
      %872 = vmatpush1.bf16.msra.mxu0 %v554
      %873 = vmatprep.subr.bf16.mxu0 0
      %874 = vmatpush1.bf16.msra.mxu0 %v557
      %875 = vmatprep.subr.bf16.mxu0 0
      %876 = vmatpush1.bf16.msra.mxu0 %v560
      %877 = vmatprep.subr.bf16.mxu0 0
      %878 = vmatpush1.bf16.msra.mxu0 %v563
      %879 = vmatprep.subr.bf16.mxu0 0
      %880 = vmatpush1.bf16.msra.mxu0 %v566
      %881 = vmatprep.subr.bf16.mxu0 0
      %882 = vmatpush1.bf16.msra.mxu0 %v569
      %883 = vmatprep.subr.bf16.mxu0 0
      %884 = vmatpush1.bf16.msra.mxu0 %v572
      %885 = vmatprep.subr.bf16.mxu0 0
      %886 = vmatpush1.bf16.msra.mxu0 0
      %887 = vmatprep.subr.bf16.mxu0 0
      %888 = vmatpush1.bf16.msra.mxu0 0
      %889 = vmatprep.subr.bf16.mxu0 0
      %890 = vmatpush1.bf16.msra.mxu0 0
      %891 = vmatprep.subr.bf16.mxu0 0
      %892 = vmatpush1.bf16.msra.mxu0 0
      %893 = vmatprep.subr.bf16.mxu0 0
      %894 = vmatpush1.bf16.msra.mxu0 0
      %895 = vmatprep.subr.bf16.mxu0 0
      %896 = vmatpush1.bf16.msra.mxu0 0
      %897 = vmatprep.subr.bf16.mxu0 0
      %898 = vmatpush1.bf16.msra.mxu0 0
      %899 = vmatprep.subr.bf16.mxu0 0
      %900 = vmatpush1.bf16.msra.mxu0 0
      %901 = vmatprep.mubr.bf16.mxu0 0
      %902 = vmatmul.mubr.bf16.gmra.mrb[0].mxu0 %v827
      %v903 = vpop.f32.mrb[0].mxu0
      %v904 = vadd.f32 0.0, %v903
      %v905 = vpop.f32.mrb[0].mxu0
      %v906 = vpop.f32.mrb[0].mxu0
      %v907 = vpop.f32.mrb[0].mxu0
      %908 = vdwg.mxu0
      %v909 = vadd.f32 %v824, %v863
      %v910 = vxor.u32 %v909, 2147483648
      %v911 = vmul.f32 %v910, 1.442695
      %v912 = vpow.pop %v911
      %v913 = vadd.f32 %v912, 1.0
      %v914 = vrcp.pop %v913
      %v915 = vmul.f32 1.0, %v914
      %v916 = vadd.f32 %v825, %v865
      %v917 = vxor.u32 %v916, 2147483648
      %v918 = vmul.f32 %v917, 1.442695
      %v919 = vpow.pop %v918
      %v920 = vadd.f32 %v919, 1.0
      %v921 = vrcp.pop %v920
      %v922 = vmul.f32 1.0, %v921
      %v923 = vmul.f32 %v915, %v904
      %v924 = vadd.f32 %v826, %v923
      %v925 = vtanh.pop %v924
      %v926 = vsub.f32 1.0, %v922
      %v927 = vmul.f32 %v926, %v925
      %v928 = vmul.f32 %v922, %v814
      %v929 = vadd.f32 %v927, %v928
      %s930 = scalar_lea.vmem [#allocation10], %s818
      %931 = vst [vmem:[%s930] sm:$0xff] %v929
      %s932 = sadd.s32 %s701, 3
      %s933 = smul.u32 %s932, 8
      %s934 = sshra.s32 %s933, 3
      %s935 = sand.u32 %s933, 7
      %s936 = smul.u32 %s934, 3
      %s937 = smul.addr %s936, 8
      %s938 = scalar_lea.vmem [#allocation3], %s937
      %v939 = vld [vmem:[%s938] sm:$0xff]
      %v940 = vld [vmem:[%s938 + $0x8] sm:$0xff]
      %v941 = vld [vmem:[%s938 + $0x10] sm:$0xff]
      %v942 = vpack.c.bf16 %v929, %v929
      %943 = vmatprep.subr.bf16.mxu0 %v550
      %944 = vmatpush1.bf16.msra.mxu0 %v549
      %945 = vmatprep.subr.bf16.mxu0 %v553
      %946 = vmatpush1.bf16.msra.mxu0 %v552
      %947 = vmatprep.subr.bf16.mxu0 %v556
      %948 = vmatpush1.bf16.msra.mxu0 %v555
      %949 = vmatprep.subr.bf16.mxu0 %v559
      %950 = vmatpush1.bf16.msra.mxu0 %v558
      %951 = vmatprep.subr.bf16.mxu0 %v562
      %952 = vmatpush1.bf16.msra.mxu0 %v561
      %953 = vmatprep.subr.bf16.mxu0 %v565
      %954 = vmatpush1.bf16.msra.mxu0 %v564
      %955 = vmatprep.subr.bf16.mxu0 %v568
      %956 = vmatpush1.bf16.msra.mxu0 %v567
      %957 = vmatprep.subr.bf16.mxu0 %v571
      %958 = vmatpush1.bf16.msra.mxu0 %v570
      %959 = vmatprep.subr.bf16.mxu0 0
      %960 = vmatpush1.bf16.msra.mxu0 0
      %961 = vmatprep.subr.bf16.mxu0 0
      %962 = vmatpush1.bf16.msra.mxu0 0
      %963 = vmatprep.subr.bf16.mxu0 0
      %964 = vmatpush1.bf16.msra.mxu0 0
      %965 = vmatprep.subr.bf16.mxu0 0
      %966 = vmatpush1.bf16.msra.mxu0 0
      %967 = vmatprep.subr.bf16.mxu0 0
      %968 = vmatpush1.bf16.msra.mxu0 0
      %969 = vmatprep.subr.bf16.mxu0 0
      %970 = vmatpush1.bf16.msra.mxu0 0
      %971 = vmatprep.subr.bf16.mxu0 0
      %972 = vmatpush1.bf16.msra.mxu0 0
      %973 = vmatprep.subr.bf16.mxu0 0
      %974 = vmatpush1.bf16.msra.mxu0 0
      %975 = vmatprep.mubr.bf16.mxu0 0
      %976 = vmatmul.mubr.bf16.gmra.mrb[0].mxu0 %v942
      %v977 = vpop.f32.mrb[0].mxu0
      %v978 = vadd.f32 0.0, %v977
      %v979 = vpop.f32.mrb[0].mxu0
      %v980 = vadd.f32 0.0, %v979
      %v981 = vpop.f32.mrb[0].mxu0
      %v982 = vpop.f32.mrb[0].mxu0
      %983 = vdwg.mxu0
      %984 = vmatprep.subr.bf16.mxu0 0
      %985 = vmatpush1.bf16.msra.mxu0 %v551
      %986 = vmatprep.subr.bf16.mxu0 0
      %987 = vmatpush1.bf16.msra.mxu0 %v554
      %988 = vmatprep.subr.bf16.mxu0 0
      %989 = vmatpush1.bf16.msra.mxu0 %v557
      %990 = vmatprep.subr.bf16.mxu0 0
      %991 = vmatpush1.bf16.msra.mxu0 %v560
      %992 = vmatprep.subr.bf16.mxu0 0
      %993 = vmatpush1.bf16.msra.mxu0 %v563
      %994 = vmatprep.subr.bf16.mxu0 0
      %995 = vmatpush1.bf16.msra.mxu0 %v566
      %996 = vmatprep.subr.bf16.mxu0 0
      %997 = vmatpush1.bf16.msra.mxu0 %v569
      %998 = vmatprep.subr.bf16.mxu0 0
      %999 = vmatpush1.bf16.msra.mxu0 %v572
      %1000 = vmatprep.subr.bf16.mxu0 0
      %1001 = vmatpush1.bf16.msra.mxu0 0
      %1002 = vmatprep.subr.bf16.mxu0 0
      %1003 = vmatpush1.bf16.msra.mxu0 0
      %1004 = vmatprep.subr.bf16.mxu0 0
      %1005 = vmatpush1.bf16.msra.mxu0 0
      %1006 = vmatprep.subr.bf16.mxu0 0
      %1007 = vmatpush1.bf16.msra.mxu0 0
      %1008 = vmatprep.subr.bf16.mxu0 0
      %1009 = vmatpush1.bf16.msra.mxu0 0
      %1010 = vmatprep.subr.bf16.mxu0 0
      %1011 = vmatpush1.bf16.msra.mxu0 0
      %1012 = vmatprep.subr.bf16.mxu0 0
      %1013 = vmatpush1.bf16.msra.mxu0 0
      %1014 = vmatprep.subr.bf16.mxu0 0
      %1015 = vmatpush1.bf16.msra.mxu0 0
      %1016 = vmatprep.mubr.bf16.mxu0 0
      %1017 = vmatmul.mubr.bf16.gmra.mrb[0].mxu0 %v942
      %v1018 = vpop.f32.mrb[0].mxu0
      %v1019 = vadd.f32 0.0, %v1018
      %v1020 = vpop.f32.mrb[0].mxu0
      %v1021 = vpop.f32.mrb[0].mxu0
      %v1022 = vpop.f32.mrb[0].mxu0
      %1023 = vdwg.mxu0
      %v1024 = vadd.f32 %v939, %v978
      %v1025 = vxor.u32 %v1024, 2147483648
      %v1026 = vmul.f32 %v1025, 1.442695
      %v1027 = vpow.pop %v1026
      %v1028 = vadd.f32 %v1027, 1.0
      %v1029 = vrcp.pop %v1028
      %v1030 = vmul.f32 1.0, %v1029
      %v1031 = vadd.f32 %v940, %v980
      %v1032 = vxor.u32 %v1031, 2147483648
      %v1033 = vmul.f32 %v1032, 1.442695
      %v1034 = vpow.pop %v1033
      %v1035 = vadd.f32 %v1034, 1.0
      %v1036 = vrcp.pop %v1035
      %v1037 = vmul.f32 1.0, %v1036
      %v1038 = vmul.f32 %v1030, %v1019
      %v1039 = vadd.f32 %v941, %v1038
      %v1040 = vtanh.pop %v1039
      %v1041 = vsub.f32 1.0, %v1037
      %v1042 = vmul.f32 %v1041, %v1040
      %v1043 = vmul.f32 %v1037, %v929
      %v1044 = vadd.f32 %v1042, %v1043
      %s1045 = scalar_lea.vmem [#allocation10], %s933
      %1046 = vst [vmem:[%s1045] sm:$0xff] %v1044
    $region34: #{tpu_custom_call.1} parent=1 // loop_footer
      %s457 = sadd.s32 1, %s453
    $region35: #{tpu_custom_call.1} parent=1 // loop_footer_branch
      %452 = sbr.rel target = $region31
    $region36: #{tpu_custom_call.1} parent=1 // loop_exit
      _
    %1047 = vst [vmem:[#allocation2] sm:$0xff] %v458
    %1048 = vst [vmem:[#allocation11] sm:$0xff] %v458
    // Predicated region
    $region37: #{tpu_custom_call.1} parent=1 // pred_check
      _
    $region38: #{tpu_custom_call.1} parent=1 // pred_check_branch
      %1050 = sbr.rel (0) target = $region40
    $region39: #{tpu_custom_call.1} parent=1 // pred_region
      %s1052 = ssub.s32 1024, 1024
      %1053 = vsyncadd [#allocation6], %s1052
      %s1054 = sshll.u32 [#allocation10], 4
      %s1055 = int_to_ptr.vmem [resolvable:$true] %s1054
      %1060 = dma.vmem_to_hbm [thread:$0]  %s1055, 1024, %s3, [#allocation6], 128, 128, 8
    $region40: #{tpu_custom_call.1} parent=1 // pred_fallthru
      _
    // Predicated region
    $region41: #{tpu_custom_call.1} parent=1 // pred_check
      _
    $region42: #{tpu_custom_call.1} parent=1 // pred_check_branch
      %1062 = sbr.rel (0) target = $region44
    $region43: #{tpu_custom_call.1} parent=1 // pred_region
      %s1064 = ssub.s32 128, 128
      %1065 = vsyncadd [#allocation12], %s1064
      %s1067 = sshll.u32 [#allocation11], 4
      %s1068 = int_to_ptr.vmem [resolvable:$true] %s1067
      %1070 = dma.vmem_to_hbm [thread:$0]  %s1068, 128, %s4, [#allocation12]
    $region44: #{tpu_custom_call.1} parent=1 // pred_fallthru
      _
    // Predicated region
    $region45: #{tpu_custom_call.1} parent=1 // pred_check
      _
    $region46: #{tpu_custom_call.1} parent=1 // pred_check_branch
      %1072 = sbr.rel (0) target = $region48
    $region47: #{tpu_custom_call.1} parent=1 // pred_region
      %1073 = dma.done [#allocation6], 1024
    $region48: #{tpu_custom_call.1} parent=1 // pred_fallthru
      _
    // Predicated region
    $region49: #{tpu_custom_call.1} parent=1 // pred_check
      _
    $region50: #{tpu_custom_call.1} parent=1 // pred_check_branch
      %1075 = sbr.rel (0) target = $region52
    $region51: #{tpu_custom_call.1} parent=1 // pred_region
      %1076 = dma.done [#allocation12], 128
    $region52: #{tpu_custom_call.1} parent=1 // pred_fallthru
      _
    %1077 = vsyncpa [#allocation5], 1
    %1078 = vsyncpa [#allocation8], 1
    %1079 = vsyncpa [#allocation6], 1
    %1080 = vsyncpa [#allocation12], 1

</llo_original>
